<compile_context>
chip_gen: v5e
topology: v5e:2x2
jax: 0.10.0
libtpu: 0.0.40
codegen_flags: <defaults>
</compile_context>

<pallas_src>
import jax
import jax.numpy as jnp
import numpy as np
from jax.experimental import pallas as pl
from jax.experimental.pallas import tpu as pltpu


# ----------------------------- Pallas kernels ------------------------------ #

def _dwconv(x, w_ref, b_ref):
    """Per-lane (depthwise) cross-correlation along the sublane axis, zero pad.

    x: (F, W) activations (W lanes, per-lane channels), w_ref: (K, W) taps
    already tiled per lane in the wrapper, b_ref: (1, W) bias.
    Matches nn.Conv2d(nc, nc, (K, 1), padding=(K//2, 0), groups=nc).
    """
    K = w_ref.shape[0]
    pad = K // 2
    F = x.shape[0]
    xp = jnp.pad(x, ((pad, pad), (0, 0)))
    acc = xp[0:F, :] * w_ref[0:1, :]                 # init with first tap
    for k in range(1, K):                            # static unrolled (K=3 or 7)
        acc = acc + xp[k:k + F, :] * w_ref[k:k + 1, :]
    return acc + b_ref[...]


def freq_process_kernel(x_ref, w1_ref, b1_ref, w2_ref, b2_ref, o_ref):
    """FreBlockSpa on a (1, Fh, 2*N*C) tile.

    Real part lives in lanes [0, N*C), imag part in lanes [N*C, 2*N*C); the
    tiled weights carry the matching real/imag taps, so one pass does both
    chains: dwconv3 -> LeakyReLU(0.1) -> dwconv7.
    """
    x = x_ref[0]                                     # (Fh, 2*N*C)
    h = _dwconv(x, w1_ref, b1_ref)
    h = jnp.where(h >= 0, h, 0.1 * h)                # LeakyReLU(0.1)
    o_ref[0] = _dwconv(h, w2_ref, b2_ref)


def spatial_conv_kernel(x_ref, xori_ref, w3_ref, b_ref, o_ref):
    """frequency_spatial: Conv2d(C, C, (3,1), pad (1,0)) + residual add.

    x_ref tile: (1, L, N*C); w3_ref: (3*N*C, N*C) block-diagonal (kron(I_N, W_k)
    stacked over the 3 taps) built in the wrapper; b_ref: (1, N*C).
    The 3 shifted matmuls are fused into ONE lane-dense MXU matmul.
    """
    x = x_ref[0]                                     # (L, N*C)
    L = x.shape[0]
    xp = jnp.pad(x, ((1, 1), (0, 0)))
    x3 = jnp.concatenate([xp[0:L, :], xp[1:L + 1, :], xp[2:L + 2, :]],
                         axis=-1)                    # (L, 3*N*C)
    y = jnp.dot(x3, w3_ref[...], preferred_element_type=jnp.float32)
    o_ref[0] = y + b_ref[...] + xori_ref[0]


# --------------------------------- Wrapper --------------------------------- #

def ftim_forward(x, params):
    """x: (B, C, L, N) float32 -> (B, C, L, N) float32 (FTIM.forward)."""
    B, C, L, N = x.shape
    Fh = L // 2 + 1
    W = N * C               # lane width of the spatial stage (128 at N=32, C=4)
    W2 = 2 * W              # real|imag fused lane width of the frequency stage

    # (B, C, L, N) -> (B, L, N, C); lane index will be n*C + c.
    x_t = jnp.transpose(x, (0, 2, 3, 1)).astype(jnp.float32)        # (B, L, N, C)
    xf = jnp.fft.rfft(x_t, axis=1, norm='ortho')                    # (B, Fh, N, C)
    ri = jnp.concatenate([jnp.real(xf), jnp.imag(xf)], axis=2)      # (B, Fh, 2N, C)
    ri = ri.reshape(B, Fh, W2).astype(jnp.float32)                  # [real | imag]

    # Pre-tile the tiny per-channel depthwise weights across N (and real/imag)
    # in the wrapper, so the kernels see full-lane-width operands.
    def lane_tile(w):                                               # (K, C)->(K, N*C)
        return jnp.tile(w.astype(jnp.float32), (1, N))

    w1 = jnp.concatenate([lane_tile(params['wr1']), lane_tile(params['wi1'])], axis=1)
    b1 = jnp.concatenate([lane_tile(params['br1']), lane_tile(params['bi1'])], axis=1)
    w2 = jnp.concatenate([lane_tile(params['wr2']), lane_tile(params['wi2'])], axis=1)
    b2 = jnp.concatenate([lane_tile(params['br2']), lane_tile(params['bi2'])], axis=1)

    full2 = lambda shape: pl.BlockSpec(shape, lambda i: (0, 0))
    tile3 = lambda d1, d2: pl.BlockSpec((1, d1, d2), lambda i: (i, 0, 0))

    ri_out = pl.pallas_call(
        freq_process_kernel,
        out_shape=jax.ShapeDtypeStruct((B, Fh, W2), jnp.float32),
        grid=(B,),
        in_specs=[tile3(Fh, W2),
                  full2((3, W2)), full2((1, W2)),
                  full2((7, W2)), full2((1, W2))],
        out_specs=tile3(Fh, W2),
        compiler_params=pltpu.CompilerParams(dimension_semantics=("parallel",)),
    )(ri, w1, b1, w2, b2)

    real_o = ri_out[:, :, :W].reshape(B, Fh, N, C)
    imag_o = ri_out[:, :, W:].reshape(B, Fh, N, C)
    x_sp = jnp.fft.irfft(jax.lax.complex(real_o, imag_o), n=L, axis=1,
                         norm='ortho').astype(jnp.float32)           # (B, L, N, C)
    x_sp = x_sp.reshape(B, L, W)
    xori = x_t.reshape(B, L, W)

    # Block-diagonal channel-mixing weight: lanes are n*C + c, so mixing only
    # within each group of C == matmul with kron(I_N, W_k); the 3 taps are
    # stacked along the contraction axis so the kernel does a single dot.
    eye_n = jnp.eye(N, dtype=jnp.float32)
    w3 = jnp.concatenate(
        [jnp.kron(eye_n, params['ws'][k].astype(jnp.float32)) for k in range(3)],
        axis=0)                                                      # (3*N*C, N*C)
    b3 = lane_tile(params['bs'])                                     # (1, N*C)

    out_f = pl.pallas_call(
        spatial_conv_kernel,
        out_shape=jax.ShapeDtypeStruct((B, L, W), jnp.float32),
        grid=(B,),
        in_specs=[tile3(L, W), tile3(L, W),
                  full2((3 * W, W)), full2((1, W))],
        out_specs=tile3(L, W),
        compiler_params=pltpu.CompilerParams(dimension_semantics=("parallel",)),
    )(x_sp, xori, w3, b3)

    out = out_f.reshape(B, L, N, C)
    return jnp.transpose(out, (0, 3, 1, 2))                          # (B, C, L, N)


# ---------------------- pure-JAX reference (no Pallas) --------------------- #

def ref_forward(x, p):
    B, C, L, N = x.shape
    x_t = jnp.transpose(x, (0, 3, 2, 1)).astype(jnp.float32)        # (B, N, L, C)
    xf = jnp.fft.rfft(x_t, axis=2, norm='ortho')

    def dw(v, w, b):
        K = w.shape[0]
        pad = K // 2
        vp = jnp.pad(v, ((0, 0), (0, 0), (pad, pad), (0, 0)))
        out = sum(vp[:, :, k:k + v.shape[2], :] * w[k][None, None, None, :]
                  for k in range(K))
        return out + b

    r = dw(jnp.real(xf).astype(jnp.float32), p['wr1'], p['br1'])
    r = jnp.where(r >= 0, r, 0.1 * r)
    r = dw(r, p['wr2'], p['br2'])
    im = dw(jnp.imag(xf).astype(jnp.float32), p['wi1'], p['bi1'])
    im = jnp.where(im >= 0, im, 0.1 * im)
    im = dw(im, p['wi2'], p['bi2'])

    xsp = jnp.fft.irfft(jax.lax.complex(r, im), n=L, axis=2,
                        norm='ortho').astype(jnp.float32)
    xp = jnp.pad(xsp, ((0, 0), (0, 0), (1, 1), (0, 0)))
    conv = sum(jnp.einsum('bnlc,cd->bnld', xp[:, :, k:k + L, :], p['ws'][k])
               for k in range(3))
    out = conv + p['bs'] + x_t
    return jnp.transpose(out, (0, 3, 2, 1))


# ------------------------------ params & main ------------------------------ #

def init_params(key, C):
    ks = jax.random.split(key, 10)
    f32 = jnp.float32
    return {
        # FreBlockSpa.processreal: dw conv (3,1) + dw conv (7,1)
        'wr1': jax.random.normal(ks[0], (3, C), f32) * 0.2,
        'br1': jax.random.normal(ks[1], (1, C), f32) * 0.1,
        'wr2': jax.random.normal(ks[2], (7, C), f32) * 0.2,
        'br2': jax.random.normal(ks[3], (1, C), f32) * 0.1,
        # FreBlockSpa.processimag
        'wi1': jax.random.normal(ks[4], (3, C), f32) * 0.2,
        'bi1': jax.random.normal(ks[5], (1, C), f32) * 0.1,
        'wi2': jax.random.normal(ks[6], (7, C), f32) * 0.2,
        'bi2': jax.random.normal(ks[7], (1, C), f32) * 0.1,
        # frequency_spatial: Conv2d(C, C, (3,1), pad (1,0)); ws[k, ci, co]
        'ws': jax.random.normal(ks[8], (3, C, C), f32) * 0.2,
        'bs': jax.random.normal(ks[9], (1, C), f32) * 0.1,
    }


if __name__ == "__main__":
    key = jax.random.PRNGKey(0)
    kx, kp = jax.random.split(key)

    # N*C = 128 -> lane-dense tiles; 2*N*C = 256 for the fused real/imag stage.
    B, C, L, N = 2, 4, 16, 32
    x = jax.random.normal(kx, (B, C, L, N), jnp.float32)
    params = init_params(kp, C)

    out = jax.block_until_ready(ftim_forward(x, params))
    ref = jax.block_until_ready(ref_forward(x, params))

    assert out.shape == (B, C, L, N)
    np.testing.assert_allclose(np.asarray(out), np.asarray(ref),
                               rtol=5e-4, atol=5e-4)
    print("KERNEL_OK")
</pallas_src>

<mosaic_0001>
module attributes {stable_mosaic.version = 11 : i64} {
  func.func @freq_process_kernel(%arg0: i32, %arg1: memref<1x9x256xf32, #tpu.memory_space<vmem>>, %arg2: memref<3x256xf32, #tpu.memory_space<vmem>>, %arg3: memref<1x256xf32, #tpu.memory_space<vmem>>, %arg4: memref<7x256xf32, #tpu.memory_space<vmem>>, %arg5: memref<1x256xf32, #tpu.memory_space<vmem>>, %arg6: memref<1x9x256xf32, #tpu.memory_space<vmem>>) attributes {dimension_semantics = [#tpu.dimension_semantics<parallel>], iteration_bounds = array<i64: 2>, scalar_prefetch = 0 : i64, scratch_operands = 0 : i64, tpu.core_type = #tpu.core_type<tc>, window_params = [{transform_indices = @transform_0, window_bounds = array<i64: 1, 9, 256>}, {pipeline_mode = #tpu.pipeline_mode<synchronous>, transform_indices = @transform_1, window_bounds = array<i64: 3, 256>}, {pipeline_mode = #tpu.pipeline_mode<synchronous>, transform_indices = @transform_2, window_bounds = array<i64: 1, 256>}, {pipeline_mode = #tpu.pipeline_mode<synchronous>, transform_indices = @transform_3, window_bounds = array<i64: 7, 256>}, {pipeline_mode = #tpu.pipeline_mode<synchronous>, transform_indices = @transform_4, window_bounds = array<i64: 1, 256>}, {transform_indices = @transform_5, window_bounds = array<i64: 1, 9, 256>}]} {
    %c0 = arith.constant 0 : index
    %c0_0 = arith.constant 0 : index
    %c0_1 = arith.constant 0 : index
    %0 = vector.load %arg1[%c0, %c0_0, %c0_1] : memref<1x9x256xf32, #tpu.memory_space<vmem>>, vector<1x9x256xf32>
    %1 = vector.shape_cast %0 : vector<1x9x256xf32> to vector<9x256xf32>
    %c0_i32 = arith.constant 0 : i32
    %2 = arith.sitofp %c0_i32 : i32 to f32
    %3 = vector.broadcast %2 : f32 to vector<1x256xf32>
    %4 = tpu.concatenate %3, %1 in 0 : vector<1x256xf32>, vector<9x256xf32> -> vector<10x256xf32>
    %5 = vector.broadcast %2 : f32 to vector<1x256xf32>
    %6 = tpu.concatenate %4, %5 in 0 : vector<10x256xf32>, vector<1x256xf32> -> vector<11x256xf32>
    %7 = vector.extract_strided_slice %6 {offsets = [0, 0], sizes = [9, 256], strides = [1, 1]} : vector<11x256xf32> to vector<9x256xf32>
    %c0_2 = arith.constant 0 : index
    %c0_3 = arith.constant 0 : index
    %8 = vector.load %arg2[%c0_2, %c0_3] : memref<3x256xf32, #tpu.memory_space<vmem>>, vector<1x256xf32>
    %9 = vector.broadcast %8 : vector<1x256xf32> to vector<9x256xf32>
    %10 = arith.mulf %7, %9 : vector<9x256xf32>
    %11 = vector.extract_strided_slice %6 {offsets = [1, 0], sizes = [9, 256], strides = [1, 1]} : vector<11x256xf32> to vector<9x256xf32>
    %c1 = arith.constant 1 : index
    %c0_4 = arith.constant 0 : index
    %12 = vector.load %arg2[%c1, %c0_4] : memref<3x256xf32, #tpu.memory_space<vmem>>, vector<1x256xf32>
    %13 = vector.broadcast %12 : vector<1x256xf32> to vector<9x256xf32>
    %14 = arith.mulf %11, %13 : vector<9x256xf32>
    %15 = arith.addf %10, %14 : vector<9x256xf32>
    %16 = vector.extract_strided_slice %6 {offsets = [2, 0], sizes = [9, 256], strides = [1, 1]} : vector<11x256xf32> to vector<9x256xf32>
    %c2 = arith.constant 2 : index
    %c0_5 = arith.constant 0 : index
    %17 = vector.load %arg2[%c2, %c0_5] : memref<3x256xf32, #tpu.memory_space<vmem>>, vector<1x256xf32>
    %18 = vector.broadcast %17 : vector<1x256xf32> to vector<9x256xf32>
    %19 = arith.mulf %16, %18 : vector<9x256xf32>
    %20 = arith.addf %15, %19 : vector<9x256xf32>
    %c0_6 = arith.constant 0 : index
    %c0_7 = arith.constant 0 : index
    %21 = vector.load %arg3[%c0_6, %c0_7] : memref<1x256xf32, #tpu.memory_space<vmem>>, vector<1x256xf32>
    %22 = vector.broadcast %21 : vector<1x256xf32> to vector<9x256xf32>
    %23 = arith.addf %20, %22 : vector<9x256xf32>
    %cst = arith.constant 0.000000e+00 : f32
    %24 = vector.broadcast %cst : f32 to vector<9x256xf32>
    %25 = arith.cmpf oge, %23, %24 : vector<9x256xf32>
    %cst_8 = arith.constant 1.000000e-01 : f32
    %26 = vector.broadcast %cst_8 : f32 to vector<9x256xf32>
    %27 = arith.mulf %26, %23 : vector<9x256xf32>
    %28 = arith.select %25, %23, %27 : vector<9x256xi1>, vector<9x256xf32>
    %c0_i32_9 = arith.constant 0 : i32
    %29 = arith.sitofp %c0_i32_9 : i32 to f32
    %30 = vector.broadcast %29 : f32 to vector<3x256xf32>
    %31 = tpu.concatenate %30, %28 in 0 : vector<3x256xf32>, vector<9x256xf32> -> vector<12x256xf32>
    %32 = vector.broadcast %29 : f32 to vector<3x256xf32>
    %33 = tpu.concatenate %31, %32 in 0 : vector<12x256xf32>, vector<3x256xf32> -> vector<15x256xf32>
    %34 = vector.extract_strided_slice %33 {offsets = [0, 0], sizes = [9, 256], strides = [1, 1]} : vector<15x256xf32> to vector<9x256xf32>
    %c0_10 = arith.constant 0 : index
    %c0_11 = arith.constant 0 : index
    %35 = vector.load %arg4[%c0_10, %c0_11] : memref<7x256xf32, #tpu.memory_space<vmem>>, vector<1x256xf32>
    %36 = vector.broadcast %35 : vector<1x256xf32> to vector<9x256xf32>
    %37 = arith.mulf %34, %36 : vector<9x256xf32>
    %38 = vector.extract_strided_slice %33 {offsets = [1, 0], sizes = [9, 256], strides = [1, 1]} : vector<15x256xf32> to vector<9x256xf32>
    %c1_12 = arith.constant 1 : index
    %c0_13 = arith.constant 0 : index
    %39 = vector.load %arg4[%c1_12, %c0_13] : memref<7x256xf32, #tpu.memory_space<vmem>>, vector<1x256xf32>
    %40 = vector.broadcast %39 : vector<1x256xf32> to vector<9x256xf32>
    %41 = arith.mulf %38, %40 : vector<9x256xf32>
    %42 = arith.addf %37, %41 : vector<9x256xf32>
    %43 = vector.extract_strided_slice %33 {offsets = [2, 0], sizes = [9, 256], strides = [1, 1]} : vector<15x256xf32> to vector<9x256xf32>
    %c2_14 = arith.constant 2 : index
    %c0_15 = arith.constant 0 : index
    %44 = vector.load %arg4[%c2_14, %c0_15] : memref<7x256xf32, #tpu.memory_space<vmem>>, vector<1x256xf32>
    %45 = vector.broadcast %44 : vector<1x256xf32> to vector<9x256xf32>
    %46 = arith.mulf %43, %45 : vector<9x256xf32>
    %47 = arith.addf %42, %46 : vector<9x256xf32>
    %48 = vector.extract_strided_slice %33 {offsets = [3, 0], sizes = [9, 256], strides = [1, 1]} : vector<15x256xf32> to vector<9x256xf32>
    %c3 = arith.constant 3 : index
    %c0_16 = arith.constant 0 : index
    %49 = vector.load %arg4[%c3, %c0_16] : memref<7x256xf32, #tpu.memory_space<vmem>>, vector<1x256xf32>
    %50 = vector.broadcast %49 : vector<1x256xf32> to vector<9x256xf32>
    %51 = arith.mulf %48, %50 : vector<9x256xf32>
    %52 = arith.addf %47, %51 : vector<9x256xf32>
    %53 = vector.extract_strided_slice %33 {offsets = [4, 0], sizes = [9, 256], strides = [1, 1]} : vector<15x256xf32> to vector<9x256xf32>
    %c4 = arith.constant 4 : index
    %c0_17 = arith.constant 0 : index
    %54 = vector.load %arg4[%c4, %c0_17] : memref<7x256xf32, #tpu.memory_space<vmem>>, vector<1x256xf32>
    %55 = vector.broadcast %54 : vector<1x256xf32> to vector<9x256xf32>
    %56 = arith.mulf %53, %55 : vector<9x256xf32>
    %57 = arith.addf %52, %56 : vector<9x256xf32>
    %58 = vector.extract_strided_slice %33 {offsets = [5, 0], sizes = [9, 256], strides = [1, 1]} : vector<15x256xf32> to vector<9x256xf32>
    %c5 = arith.constant 5 : index
    %c0_18 = arith.constant 0 : index
    %59 = vector.load %arg4[%c5, %c0_18] : memref<7x256xf32, #tpu.memory_space<vmem>>, vector<1x256xf32>
    %60 = vector.broadcast %59 : vector<1x256xf32> to vector<9x256xf32>
    %61 = arith.mulf %58, %60 : vector<9x256xf32>
    %62 = arith.addf %57, %61 : vector<9x256xf32>
    %63 = vector.extract_strided_slice %33 {offsets = [6, 0], sizes = [9, 256], strides = [1, 1]} : vector<15x256xf32> to vector<9x256xf32>
    %c6 = arith.constant 6 : index
    %c0_19 = arith.constant 0 : index
    %64 = vector.load %arg4[%c6, %c0_19] : memref<7x256xf32, #tpu.memory_space<vmem>>, vector<1x256xf32>
    %65 = vector.broadcast %64 : vector<1x256xf32> to vector<9x256xf32>
    %66 = arith.mulf %63, %65 : vector<9x256xf32>
    %67 = arith.addf %62, %66 : vector<9x256xf32>
    %c0_20 = arith.constant 0 : index
    %c0_21 = arith.constant 0 : index
    %68 = vector.load %arg5[%c0_20, %c0_21] : memref<1x256xf32, #tpu.memory_space<vmem>>, vector<1x256xf32>
    %69 = vector.broadcast %68 : vector<1x256xf32> to vector<9x256xf32>
    %70 = arith.addf %67, %69 : vector<9x256xf32>
    %c0_22 = arith.constant 0 : index
    %c0_23 = arith.constant 0 : index
    %c0_24 = arith.constant 0 : index
    %71 = vector.load %arg6[%c0_22, %c0_23, %c0_24] : memref<1x9x256xf32, #tpu.memory_space<vmem>>, vector<1x9x256xf32>
    %72 = vector.shape_cast %71 : vector<1x9x256xf32> to vector<9x256xf32>
    %73 = vector.shape_cast %70 : vector<9x256xf32> to vector<1x9x256xf32>
    tpu.vector_store %arg6[%c0_22, %c0_23, %c0_24], %73 {strides = array<i32>} : memref<1x9x256xf32, #tpu.memory_space<vmem>>, vector<1x9x256xf32>,
    return
  }
  func.func @transform_0(%arg0: i32) -> (i32, i32, i32) {
    %c0_i32 = arith.constant 0 : i32
    %c0_i32_0 = arith.constant 0 : i32
    %c0_i32_1 = arith.constant 0 : i32
    return %arg0, %c0_i32, %c0_i32_0 : i32, i32, i32
  }
  func.func @transform_1(%arg0: i32) -> (i32, i32) {
    %c0_i32 = arith.constant 0 : i32
    %c0_i32_0 = arith.constant 0 : i32
    %c0_i32_1 = arith.constant 0 : i32
    return %c0_i32, %c0_i32_0 : i32, i32
  }
  func.func @transform_2(%arg0: i32) -> (i32, i32) {
    %c0_i32 = arith.constant 0 : i32
    %c0_i32_0 = arith.constant 0 : i32
    %c0_i32_1 = arith.constant 0 : i32
    return %c0_i32, %c0_i32_0 : i32, i32
  }
  func.func @transform_3(%arg0: i32) -> (i32, i32) {
    %c0_i32 = arith.constant 0 : i32
    %c0_i32_0 = arith.constant 0 : i32
    %c0_i32_1 = arith.constant 0 : i32
    return %c0_i32, %c0_i32_0 : i32, i32
  }
  func.func @transform_4(%arg0: i32) -> (i32, i32) {
    %c0_i32 = arith.constant 0 : i32
    %c0_i32_0 = arith.constant 0 : i32
    %c0_i32_1 = arith.constant 0 : i32
    return %c0_i32, %c0_i32_0 : i32, i32
  }
  func.func @transform_5(%arg0: i32) -> (i32, i32, i32) {
    %c0_i32 = arith.constant 0 : i32
    %c0_i32_0 = arith.constant 0 : i32
    %c0_i32_1 = arith.constant 0 : i32
    return %arg0, %c0_i32, %c0_i32_0 : i32, i32, i32
  }
}

</mosaic_0001>

<llo_original>
// kernel: tpu_custom_call.1
$region0: #{tpu_custom_call.1}
  #allocation0 [shape = 'u32[]', space=smem, size = 0x4, offset = 0x4, fixed_abs, tag = 'smem constant byte address 0x4 - core index']
  #allocation1 [shape = 'u32[72,128]{1,0:T(1,128)}', space=vmem, size = 0x9000, scoped, tag = 'internal scratch']
  %s0 = inlined_call_operand.vmem [shape: f32[2,9,256], index: 0, kind: input, shape index: {}]
  %s1 = inlined_call_operand.vmem [shape: f32[3,256], index: 1, kind: input, shape index: {}]
  %s2 = inlined_call_operand.vmem [shape: f32[1,256], index: 2, kind: input, shape index: {}]
  %s3 = inlined_call_operand.vmem [shape: f32[7,256], index: 3, kind: input, shape index: {}]
  %s4 = inlined_call_operand.vmem [shape: f32[1,256], index: 4, kind: input, shape index: {}]
  %s5 = inlined_call_operand.vmem [shape: f32[2,9,256], index: 5, kind: output, shape index: {}]
  %s6 = sld [smem:[#allocation0]]
  $region53: #{tpu_custom_call.1} parent=0
    _
  %s8 = ssub.s32 1, %s6
  %s9 = scalar_select 0, %s8, %s6
  loop: start=0, step=1, limit=4
  $region2: #{tpu_custom_call.1} parent=0 // loop_pre_header
    _
  $region3: #{tpu_custom_call.1} parent=0 // loop_header
    %s11 = sphi 0, %s15
    %p12 = scmp.ge.s32.totalorder %s11, 4
    %s21 = sphi 0, %s23
    %s24 = sphi 0, %s21
    %s25 = sphi 0, %s24
    %s41 = sphi 0, %s25
    %s45 = sphi 0, %s45
    %s47 = sphi 0, %s45
    %s48 = sphi 0, %s47
    %s62 = sphi 0, %s48
    %s66 = sphi 0, %s66
    %s68 = sphi 0, %s66
    %s69 = sphi 0, %s68
    %s83 = sphi 0, %s69
    %s87 = sphi 0, %s87
    %s89 = sphi 0, %s87
    %s90 = sphi 0, %s89
    %s104 = sphi 0, %s90
    %s108 = sphi 0, %s108
    %s110 = sphi 0, %s108
    %s111 = sphi 0, %s110
    %s125 = sphi 0, %s111
    %s131 = sphi 0, %s133
    %s134 = sphi 0, %s131
    %s135 = sphi 0, %s134
    %s151 = sphi 0, %s135
  $region4: #{tpu_custom_call.1} parent=0 // loop_header_branch
    %14 = sbr.rel (%p12) target = $region8
  $region5: #{tpu_custom_call.1} parent=0 // loop_body
    %s16 = ssub.s32 %s11, 1
    %s17 = ssub.s32 %s11, 2
    %s18 = sadd.s32 %s11, 1
    %s19 = ssub.s32 %s11, %s18
    %p20 = scmp.eq.s32.totalorder %s19, 0
    %s22 = sadd.s32 %s21, 1
    %s23 = scalar_select %p20, %s21, %s22
    %p26 = pneg %p20
    %p27 = scmp.eq.s32.totalorder %s11, 1
    %p28 = por %p26, %p27
    %p29 = scmp.ne.s32.totalorder %s21, %s24
    %p30 = scmp.eq.s32.totalorder %s11, 0
    %p31 = por %p29, %p30
    %p32 = scmp.ne.s32.totalorder %s21, %s24
    %p33 = scmp.eq.s32.totalorder %s16, 1
    %p34 = por %p32, %p33
    %p35 = scmp.ne.s32.totalorder %s24, %s25
    %p36 = scmp.eq.s32.totalorder %s16, 0
    %p37 = por %p35, %p36
    %p38 = scmp.ne.s32.totalorder %s24, %s25
    %p39 = scmp.eq.s32.totalorder %s17, 1
    %p40 = por %p38, %p39
    %p42 = scmp.ne.s32.totalorder %s25, %s41
    %p43 = scmp.eq.s32.totalorder %s17, 0
    %p44 = por %p42, %p43
    %s46 = sadd.s32 %s45, 1
    %p49 = scmp.eq.s32.totalorder %s11, 1
    %p50 = scmp.ne.s32.totalorder %s45, %s47
    %p51 = scmp.eq.s32.totalorder %s11, 0
    %p52 = por %p50, %p51
    %p53 = scmp.ne.s32.totalorder %s45, %s47
    %p54 = scmp.eq.s32.totalorder %s16, 1
    %p55 = por %p53, %p54
    %p56 = scmp.ne.s32.totalorder %s47, %s48
    %p57 = scmp.eq.s32.totalorder %s16, 0
    %p58 = por %p56, %p57
    %p59 = scmp.ne.s32.totalorder %s47, %s48
    %p60 = scmp.eq.s32.totalorder %s17, 1
    %p61 = por %p59, %p60
    %p63 = scmp.ne.s32.totalorder %s48, %s62
    %p64 = scmp.eq.s32.totalorder %s17, 0
    %p65 = por %p63, %p64
    %s67 = sadd.s32 %s66, 1
    %p70 = scmp.eq.s32.totalorder %s11, 1
    %p71 = scmp.ne.s32.totalorder %s66, %s68
    %p72 = scmp.eq.s32.totalorder %s11, 0
    %p73 = por %p71, %p72
    %p74 = scmp.ne.s32.totalorder %s66, %s68
    %p75 = scmp.eq.s32.totalorder %s16, 1
    %p76 = por %p74, %p75
    %p77 = scmp.ne.s32.totalorder %s68, %s69
    %p78 = scmp.eq.s32.totalorder %s16, 0
    %p79 = por %p77, %p78
    %p80 = scmp.ne.s32.totalorder %s68, %s69
    %p81 = scmp.eq.s32.totalorder %s17, 1
    %p82 = por %p80, %p81
    %p84 = scmp.ne.s32.totalorder %s69, %s83
    %p85 = scmp.eq.s32.totalorder %s17, 0
    %p86 = por %p84, %p85
    %s88 = sadd.s32 %s87, 1
    %p91 = scmp.eq.s32.totalorder %s11, 1
    %p92 = scmp.ne.s32.totalorder %s87, %s89
    %p93 = scmp.eq.s32.totalorder %s11, 0
    %p94 = por %p92, %p93
    %p95 = scmp.ne.s32.totalorder %s87, %s89
    %p96 = scmp.eq.s32.totalorder %s16, 1
    %p97 = por %p95, %p96
    %p98 = scmp.ne.s32.totalorder %s89, %s90
    %p99 = scmp.eq.s32.totalorder %s16, 0
    %p100 = por %p98, %p99
    %p101 = scmp.ne.s32.totalorder %s89, %s90
    %p102 = scmp.eq.s32.totalorder %s17, 1
    %p103 = por %p101, %p102
    %p105 = scmp.ne.s32.totalorder %s90, %s104
    %p106 = scmp.eq.s32.totalorder %s17, 0
    %p107 = por %p105, %p106
    %s109 = sadd.s32 %s108, 1
    %p112 = scmp.eq.s32.totalorder %s11, 1
    %p113 = scmp.ne.s32.totalorder %s108, %s110
    %p114 = scmp.eq.s32.totalorder %s11, 0
    %p115 = por %p113, %p114
    %p116 = scmp.ne.s32.totalorder %s108, %s110
    %p117 = scmp.eq.s32.totalorder %s16, 1
    %p118 = por %p116, %p117
    %p119 = scmp.ne.s32.totalorder %s110, %s111
    %p120 = scmp.eq.s32.totalorder %s16, 0
    %p121 = por %p119, %p120
    %p122 = scmp.ne.s32.totalorder %s110, %s111
    %p123 = scmp.eq.s32.totalorder %s17, 1
    %p124 = por %p122, %p123
    %p126 = scmp.ne.s32.totalorder %s111, %s125
    %p127 = scmp.eq.s32.totalorder %s17, 0
    %p128 = por %p126, %p127
    %s129 = ssub.s32 %s11, %s18
    %p130 = scmp.eq.s32.totalorder %s129, 0
    %s132 = sadd.s32 %s131, 1
    %s133 = scalar_select %p130, %s131, %s132
    %p136 = pneg %p130
    %p137 = scmp.eq.s32.totalorder %s11, 1
    %p138 = por %p136, %p137
    %p139 = scmp.ne.s32.totalorder %s131, %s134
    %p140 = scmp.eq.s32.totalorder %s11, 0
    %p141 = por %p139, %p140
    %p142 = scmp.ne.s32.totalorder %s131, %s134
    %p143 = scmp.eq.s32.totalorder %s16, 1
    %p144 = por %p142, %p143
    %p145 = scmp.ne.s32.totalorder %s134, %s135
    %p146 = scmp.eq.s32.totalorder %s16, 0
    %p147 = por %p145, %p146
    %p148 = scmp.ne.s32.totalorder %s134, %s135
    %p149 = scmp.eq.s32.totalorder %s17, 1
    %p150 = por %p148, %p149
    %p152 = scmp.ne.s32.totalorder %s135, %s151
    %p153 = scmp.eq.s32.totalorder %s17, 0
    %p154 = por %p152, %p153
    %p155 = scmp.le.s32.totalorder 1, %s11
    %p156 = scmp.lt.s32.totalorder %s11, 3
    %p157 = pnand %p155, %p156
    %p158 = pneg %p157
    // Predicated region
    $region9: #{tpu_custom_call.1} parent=5 // pred_check
      _
    $region10: #{tpu_custom_call.1} parent=5 // pred_check_branch
      %160 = sbr.rel (%p157) target = $region12
    $region11: #{tpu_custom_call.1} parent=5 // pred_region
      %s161 = ssub.s32 %s11, 1
      // Predicated region
      $region13: #{tpu_custom_call.1} parent=11 // pred_check
        %p162 = pneg %p58
      $region14: #{tpu_custom_call.1} parent=11 // pred_check_branch
        %164 = sbr.rel (%p162) target = $region16
      $region15: #{tpu_custom_call.1} parent=11 // pred_region
        _
      $region16: #{tpu_custom_call.1} parent=11 // pred_fallthru
        _
      // Predicated region
      $region17: #{tpu_custom_call.1} parent=11 // pred_check
        %p165 = pneg %p79
      $region18: #{tpu_custom_call.1} parent=11 // pred_check_branch
        %167 = sbr.rel (%p165) target = $region20
      $region19: #{tpu_custom_call.1} parent=11 // pred_region
        _
      $region20: #{tpu_custom_call.1} parent=11 // pred_fallthru
        _
      // Predicated region
      $region21: #{tpu_custom_call.1} parent=11 // pred_check
        %p168 = pneg %p100
      $region22: #{tpu_custom_call.1} parent=11 // pred_check_branch
        %170 = sbr.rel (%p168) target = $region24
      $region23: #{tpu_custom_call.1} parent=11 // pred_region
        _
      $region24: #{tpu_custom_call.1} parent=11 // pred_fallthru
        _
      // Predicated region
      $region25: #{tpu_custom_call.1} parent=11 // pred_check
        %p171 = pneg %p121
      $region26: #{tpu_custom_call.1} parent=11 // pred_check_branch
        %173 = sbr.rel (%p171) target = $region28
      $region27: #{tpu_custom_call.1} parent=11 // pred_region
        _
      $region28: #{tpu_custom_call.1} parent=11 // pred_fallthru
        _
    $region12: #{tpu_custom_call.1} parent=5 // pred_fallthru
      _
    %p174 = scmp.lt.s32.totalorder %s11, 2
    // Predicated region
    $region29: #{tpu_custom_call.1} parent=5 // pred_check
      %p175 = pneg %p174
    $region30: #{tpu_custom_call.1} parent=5 // pred_check_branch
      %177 = sbr.rel (%p175) target = $region32
    $region31: #{tpu_custom_call.1} parent=5 // pred_region
      // Predicated region
      $region33: #{tpu_custom_call.1} parent=31 // pred_check
        %p178 = pneg %p31
      $region34: #{tpu_custom_call.1} parent=31 // pred_check_branch
        %180 = sbr.rel (%p178) target = $region36
      $region35: #{tpu_custom_call.1} parent=31 // pred_region
        %p181 = scmp.lt.s32.totalorder %s11, 1
        %s182 = scalar_select %p181, %s11, 1
        %s183 = smul.addr %s182, 4
        %s184 = smul.addr %s183, 8
        %s185 = scalar_lea.vmem %s0, %s184
      $region36: #{tpu_custom_call.1} parent=31 // pred_fallthru
        _
    $region32: #{tpu_custom_call.1} parent=5 // pred_fallthru
      _
    %p186 = scmp.le.s32.totalorder 1, %s11
    %p187 = scmp.lt.s32.totalorder %s11, 3
    %p188 = pnand %p186, %p187
    %p189 = pneg %p188
    // Predicated region
    $region37: #{tpu_custom_call.1} parent=5 // pred_check
      _
    $region38: #{tpu_custom_call.1} parent=5 // pred_check_branch
      %191 = sbr.rel (%p188) target = $region40
    $region39: #{tpu_custom_call.1} parent=5 // pred_region
      %s192 = ssub.s32 %s11, 1
      %p193 = scmp.lt.s32.totalorder %s16, 1
      %s194 = scalar_select %p193, %s16, 1
      %s195 = smul.addr %s194, 4
      %s196 = smul.addr %s195, 8
      %s197 = scalar_lea.vmem %s0, %s196
      %p198 = pneg %p37
      %p199 = pneg %p34
      %p200 = pneg %p58
      %p201 = pneg %p55
      %p202 = pneg %p79
      %p203 = pneg %p76
      %p204 = pneg %p100
      %p205 = pneg %p97
      %p206 = pneg %p121
      %p207 = pneg %p118
      %p208 = pneg %p147
      %p209 = pneg %p144
      %p210 = scmp.lt.s32.totalorder %s16, 1
      %s211 = scalar_select %p210, %s16, 1
      %s212 = smul.addr %s211, 4
      %s213 = smul.addr %s212, 8
      %s214 = scalar_lea.vmem %s5, %s213
      %p215 = scmp.lt.s32.totalorder %s16, 1
      %s216 = scalar_select %p215, %s16, 1
      %s217 = smul.addr %s216, 4
      %s218 = smul.addr %s217, 8
      %s219 = scalar_lea.vmem %s0, %s218
      %p220 = scmp.lt.s32.totalorder %s16, 1
      %s221 = scalar_select %p220, %s16, 1
      %s222 = smul.addr %s221, 4
      %s223 = smul.addr %s222, 8
      %s224 = scalar_lea.vmem %s5, %s223
      %v225 = vld [vmem:[%s219] sm:$0xff]
      %v226 = vld [vmem:[%s219 + $0x8] sm:$0xff]
      %v227 = vld [vmem:[%s219 + $0x10] sm:$0x1]
      %v228 = vld [vmem:[%s219 + $0x18] sm:$0x1]
      %vm233 = vcmask 1040384
      %v234 = vrot.slane %v225, 7
      %v235 = vrot.slane %v226, 7
      %v236 = vrot.slane %v227, 7
      %v237 = vsel %vm233, %v234, %v236
      %v238 = vrot.slane %v228, 7
      %v239 = vsel %vm233, %v235, %v238
      %v244 = vsel %vm233, 0.0, %v234
      %v245 = vsel %vm233, 0.0, %v235
      %vm246 = vcmask 1041408
      %v247 = vsel %vm246, %v237, 0.0
      %v248 = vsel %vm246, %v239, 0.0
      %v249 = vld [vmem:[%s1] ss:$4 sm:$0x3]
      %v251 = vperm.slane %v249, 0
      %v252 = vperm.slane %v249, 1
      %v255 = vmul.f32 %v244, %v251
      %v256 = vmul.f32 %v245, %v252
      %v257 = vmul.f32 %v247, %v251
      %v258 = vmul.f32 %v248, %v252
      %s259 = scalar_lea.vmem %s1, 1
      %v260 = vld [vmem:[%s259] ss:$4 sm:$0x3]
      %v262 = vperm.slane %v260, 0
      %v263 = vperm.slane %v260, 1
      %v266 = vmul.f32 %v244, %v262
      %v267 = vmul.f32 %v245, %v263
      %v268 = vmul.f32 %v247, %v262
      %v269 = vmul.f32 %v248, %v263
      %vm274 = vcmask 1046528
      %v275 = vrot.slane %v266, 1
      %v276 = vrot.slane %v268, 1
      %v277 = vsel %vm274, %v275, %v276
      %v278 = vrot.slane %v267, 1
      %v279 = vrot.slane %v269, 1
      %v280 = vsel %vm274, %v278, %v279
      %v285 = vadd.f32 %v255, %v277
      %v286 = vadd.f32 %v256, %v280
      %v287 = vadd.f32 %v257, %v276
      %v288 = vadd.f32 %v258, %v279
      %s289 = scalar_lea.vmem %s1, 2
      %v290 = vld [vmem:[%s289] ss:$4 sm:$0x3]
      %v292 = vperm.slane %v290, 0
      %v293 = vperm.slane %v290, 1
      %v296 = vmul.f32 %v244, %v292
      %v297 = vmul.f32 %v245, %v293
      %v298 = vmul.f32 %v247, %v292
      %v299 = vmul.f32 %v248, %v293
      %vm304 = vcmask 1045504
      %v305 = vrot.slane %v296, 2
      %v306 = vrot.slane %v298, 2
      %v307 = vsel %vm304, %v305, %v306
      %v308 = vrot.slane %v297, 2
      %v309 = vrot.slane %v299, 2
      %v310 = vsel %vm304, %v308, %v309
      %v315 = vadd.f32 %v285, %v307
      %v316 = vadd.f32 %v286, %v310
      %v317 = vadd.f32 %v287, %v306
      %v318 = vadd.f32 %v288, %v309
      %v319 = vld [vmem:[%s2] sm:$0x3]
      %v321 = vperm.slane %v319, 0
      %v322 = vperm.slane %v319, 1
      %v325 = vadd.f32 %v315, %v321
      %v326 = vadd.f32 %v316, %v322
      %v327 = vadd.f32 %v317, %v321
      %v328 = vadd.f32 %v318, %v322
      %vm329 = vcmp.ge.f32.partialorder %v325, 0.0
      %vm330 = vcmp.ge.f32.partialorder %v326, 0.0
      %vm331 = vcmp.ge.f32.partialorder %v327, 0.0
      %vm332 = vcmp.ge.f32.partialorder %v328, 0.0
      %v333 = vmul.f32 %v325, 0.1
      %v334 = vmul.f32 %v326, 0.1
      %v335 = vmul.f32 %v327, 0.1
      %v336 = vmul.f32 %v328, 0.1
      %v337 = vsel %vm329, %v325, %v333
      %v338 = vsel %vm330, %v326, %v334
      %v339 = vsel %vm331, %v327, %v335
      %v340 = vsel %vm332, %v328, %v336
      %vm345 = vcmask 1042432
      %v346 = vrot.slane %v337, 5
      %v347 = vrot.slane %v338, 5
      %v348 = vrot.slane %v339, 5
      %v349 = vsel %vm345, %v346, %v348
      %v350 = vrot.slane %v340, 5
      %v351 = vsel %vm345, %v347, %v350
      %v356 = vsel %vm345, 0.0, %v346
      %v357 = vsel %vm345, 0.0, %v347
      %vm358 = vcmask 1043456
      %v359 = vsel %vm358, %v349, 0.0
      %v360 = vsel %vm358, %v351, 0.0
      %v361 = vld [vmem:[%s3] ss:$8 sm:$0x3]
      %v363 = vperm.slane %v361, 0
      %v364 = vperm.slane %v361, 1
      %v367 = vmul.f32 %v356, %v363
      %v368 = vmul.f32 %v357, %v364
      %v369 = vmul.f32 %v359, %v363
      %v370 = vmul.f32 %v360, %v364
      %s371 = scalar_lea.vmem %s3, 1
      %v372 = vld [vmem:[%s371] ss:$8 sm:$0x3]
      %v374 = vperm.slane %v372, 0
      %v375 = vperm.slane %v372, 1
      %v378 = vmul.f32 %v356, %v374
      %v379 = vmul.f32 %v357, %v375
      %v380 = vmul.f32 %v359, %v374
      %v381 = vmul.f32 %v360, %v375
      %v386 = vrot.slane %v378, 1
      %v387 = vrot.slane %v380, 1
      %v388 = vsel %vm274, %v386, %v387
      %v389 = vrot.slane %v379, 1
      %v390 = vrot.slane %v381, 1
      %v391 = vsel %vm274, %v389, %v390
      %v396 = vadd.f32 %v367, %v388
      %v397 = vadd.f32 %v368, %v391
      %v398 = vadd.f32 %v369, %v387
      %v399 = vadd.f32 %v370, %v390
      %s400 = scalar_lea.vmem %s3, 2
      %v401 = vld [vmem:[%s400] ss:$8 sm:$0x3]
      %v403 = vperm.slane %v401, 0
      %v404 = vperm.slane %v401, 1
      %v407 = vmul.f32 %v356, %v403
      %v408 = vmul.f32 %v357, %v404
      %v409 = vmul.f32 %v359, %v403
      %v410 = vmul.f32 %v360, %v404
      %v415 = vrot.slane %v407, 2
      %v416 = vrot.slane %v409, 2
      %v417 = vsel %vm304, %v415, %v416
      %v418 = vrot.slane %v408, 2
      %v419 = vrot.slane %v410, 2
      %v420 = vsel %vm304, %v418, %v419
      %v425 = vadd.f32 %v396, %v417
      %v426 = vadd.f32 %v397, %v420
      %v427 = vadd.f32 %v398, %v416
      %v428 = vadd.f32 %v399, %v419
      %s429 = scalar_lea.vmem %s3, 3
      %v430 = vld [vmem:[%s429] ss:$8 sm:$0x3]
      %v432 = vperm.slane %v430, 0
      %v433 = vperm.slane %v430, 1
      %v436 = vmul.f32 %v356, %v432
      %v437 = vmul.f32 %v357, %v433
      %v438 = vmul.f32 %v359, %v432
      %v439 = vmul.f32 %v360, %v433
      %vm444 = vcmask 1044480
      %v445 = vrot.slane %v436, 3
      %v446 = vrot.slane %v438, 3
      %v447 = vsel %vm444, %v445, %v446
      %v448 = vrot.slane %v437, 3
      %v449 = vrot.slane %v439, 3
      %v450 = vsel %vm444, %v448, %v449
      %v455 = vadd.f32 %v425, %v447
      %v456 = vadd.f32 %v426, %v450
      %v457 = vadd.f32 %v427, %v446
      %v458 = vadd.f32 %v428, %v449
      %s459 = scalar_lea.vmem %s3, 4
      %v460 = vld [vmem:[%s459] ss:$8 sm:$0x3]
      %v462 = vperm.slane %v460, 0
      %v463 = vperm.slane %v460, 1
      %v466 = vmul.f32 %v356, %v462
      %v467 = vmul.f32 %v357, %v463
      %v468 = vmul.f32 %v359, %v462
      %v469 = vmul.f32 %v360, %v463
      %v474 = vrot.slane %v466, 4
      %v475 = vrot.slane %v468, 4
      %v476 = vsel %vm358, %v474, %v475
      %v477 = vrot.slane %v467, 4
      %v478 = vrot.slane %v469, 4
      %v479 = vsel %vm358, %v477, %v478
      %v484 = vadd.f32 %v455, %v476
      %v485 = vadd.f32 %v456, %v479
      %v486 = vadd.f32 %v457, %v475
      %v487 = vadd.f32 %v458, %v478
      %s488 = scalar_lea.vmem %s3, 5
      %v489 = vld [vmem:[%s488] ss:$8 sm:$0x3]
      %v491 = vperm.slane %v489, 0
      %v492 = vperm.slane %v489, 1
      %v495 = vmul.f32 %v356, %v491
      %v496 = vmul.f32 %v357, %v492
      %v497 = vmul.f32 %v359, %v491
      %v498 = vmul.f32 %v360, %v492
      %v503 = vrot.slane %v495, 5
      %v504 = vrot.slane %v497, 5
      %v505 = vsel %vm345, %v503, %v504
      %v506 = vrot.slane %v496, 5
      %v507 = vrot.slane %v498, 5
      %v508 = vsel %vm345, %v506, %v507
      %v513 = vadd.f32 %v484, %v505
      %v514 = vadd.f32 %v485, %v508
      %v515 = vadd.f32 %v486, %v504
      %v516 = vadd.f32 %v487, %v507
      %s517 = scalar_lea.vmem %s3, 6
      %v518 = vld [vmem:[%s517] ss:$8 sm:$0x3]
      %v520 = vperm.slane %v518, 0
      %v521 = vperm.slane %v518, 1
      %v524 = vmul.f32 %v356, %v520
      %v525 = vmul.f32 %v357, %v521
      %v526 = vmul.f32 %v359, %v520
      %v527 = vmul.f32 %v360, %v521
      %v532 = vrot.slane %v524, 6
      %v533 = vrot.slane %v526, 6
      %v534 = vsel %vm246, %v532, %v533
      %v535 = vrot.slane %v525, 6
      %v536 = vrot.slane %v527, 6
      %v537 = vsel %vm246, %v535, %v536
      %v542 = vadd.f32 %v513, %v534
      %v543 = vadd.f32 %v514, %v537
      %v544 = vadd.f32 %v515, %v533
      %v545 = vadd.f32 %v516, %v536
      %v546 = vld [vmem:[%s4] sm:$0x3]
      %v548 = vperm.slane %v546, 0
      %v549 = vperm.slane %v546, 1
      %v552 = vadd.f32 %v542, %v548
      %v553 = vadd.f32 %v543, %v549
      %v554 = vadd.f32 %v544, %v548
      %v555 = vadd.f32 %v545, %v549
      %556 = vst [vmem:[%s224] sm:$0xff] %v552
      %557 = vst [vmem:[%s224 + $0x8] sm:$0xff] %v553
      %558 = vst [vmem:[%s224 + $0x10] sm:$0x1] %v554
      %559 = vst [vmem:[%s224 + $0x18] sm:$0x1] %v555
      %p560 = scmp.lt.s32.totalorder %s16, 1
      %s561 = scalar_select %p560, %s16, 1
      %s562 = smul.addr %s561, 4
      %s563 = smul.addr %s562, 8
      %s564 = scalar_lea.vmem %s5, %s563
      // Predicated region
      $region41: #{tpu_custom_call.1} parent=39 // pred_check
        %p565 = pneg %p144
      $region42: #{tpu_custom_call.1} parent=39 // pred_check_branch
        %567 = sbr.rel (%p565) target = $region44
      $region43: #{tpu_custom_call.1} parent=39 // pred_region
        _
      $region44: #{tpu_custom_call.1} parent=39 // pred_fallthru
        _
    $region40: #{tpu_custom_call.1} parent=5 // pred_fallthru
      _
    %p568 = scmp.le.s32.totalorder 2, %s11
    // Predicated region
    $region45: #{tpu_custom_call.1} parent=5 // pred_check
      %p569 = pneg %p568
    $region46: #{tpu_custom_call.1} parent=5 // pred_check_branch
      %571 = sbr.rel (%p569) target = $region48
    $region47: #{tpu_custom_call.1} parent=5 // pred_region
      %s572 = ssub.s32 %s11, 2
      // Predicated region
      $region49: #{tpu_custom_call.1} parent=47 // pred_check
        %p573 = pneg %p150
      $region50: #{tpu_custom_call.1} parent=47 // pred_check_branch
        %575 = sbr.rel (%p573) target = $region52
      $region51: #{tpu_custom_call.1} parent=47 // pred_region
        %p576 = scmp.lt.s32.totalorder %s17, 1
        %s577 = scalar_select %p576, %s17, 1
        %s578 = smul.addr %s577, 4
        %s579 = smul.addr %s578, 8
        %s580 = scalar_lea.vmem %s5, %s579
      $region52: #{tpu_custom_call.1} parent=47 // pred_fallthru
        _
    $region48: #{tpu_custom_call.1} parent=5 // pred_fallthru
      _
  $region6: #{tpu_custom_call.1} parent=0 // loop_footer
    %s15 = sadd.s32 1, %s11
  $region7: #{tpu_custom_call.1} parent=0 // loop_footer_branch
    %10 = sbr.rel target = $region3
  $region8: #{tpu_custom_call.1} parent=0 // loop_exit
    _

</llo_original>
